<compile_context>
chip_gen: v6e
topology: v6e:2x2x1
jax: 0.10.0
libtpu: 0.0.40
codegen_flags: <defaults>
</compile_context>

<pallas_src>
import functools

import jax
import jax.numpy as jnp
from jax.experimental import pallas as pl
from jax.experimental.pallas import tpu as pltpu


def _align8(n: int) -> int:
    return ((n + 7) // 8) * 8


def _slab_offsets(C: int):
    """Row offsets of each fused block inside the packed weight slab."""
    twoC = 2 * C
    o = {}
    o["w0"] = 0                      # (align8(C+1), 2C)  [dw0 | ew0], zero-row padded
    o["b0"] = _align8(C + 1)         # (8, 2C)            [db0 | eb0] in row 0
    o["w1"] = o["b0"] + 8            # (2C, 2C)           blockdiag(dw1, ew1)
    o["b1"] = o["w1"] + twoC         # (8, 2C)
    o["w2"] = o["b1"] + 8            # (2C, 2C)           blockdiag(dw2, ew2)
    o["b2"] = o["w2"] + twoC         # (8, 2C)
    o["wh0"] = o["b2"] + 8           # (2C, 2C)           [0; rw0 | nw0]
    o["bh0"] = o["wh0"] + twoC       # (8, 2C)            [rb0 | nb0]
    o["wh1"] = o["bh0"] + 8          # (2C, 2C)           blockdiag(rw1, nw1), col-padded
    o["bh1"] = o["wh1"] + twoC       # (8, 2C)            [rb1, nb1, 0, ...]
    o["rows"] = o["bh1"] + 8
    return o


def dynamics_kernel(x_ref, w_ref, out_ref, *, C):
    twoC = 2 * C
    o = _slab_offsets(C)

    def wslice(off, rows):
        return w_ref[pl.ds(off, rows), :]

    x = x_ref[...]                                    # (B, align8(C+1)), zero-padded

    # Fused trunk: dynamics_net (cols [0,C)) + embedding_net (cols [C,2C)).
    h = jnp.dot(x, wslice(o["w0"], o["b0"]), preferred_element_type=jnp.float32)
    h = jnp.maximum(h + wslice(o["b0"], 1), 0.0)
    h = jnp.dot(h, wslice(o["w1"], twoC), preferred_element_type=jnp.float32)
    h = jnp.maximum(h + wslice(o["b1"], 1), 0.0)
    h = jnp.dot(h, wslice(o["w2"], twoC), preferred_element_type=jnp.float32)
    h = h + wslice(o["b2"], 1)                        # [next_latent | embedding]

    # Fused heads: reward (col 0) + done (col 1). Dropout is identity at eval.
    g = jnp.dot(h, wslice(o["wh0"], twoC), preferred_element_type=jnp.float32)
    g = jnp.maximum(g + wslice(o["bh0"], 1), 0.0)
    t = jnp.dot(g, wslice(o["wh1"], twoC), preferred_element_type=jnp.float32)
    t = t + wslice(o["bh1"], 1)

    out_ref[...] = jnp.concatenate(
        [h[:, :C], t[:, 0:1], jax.nn.sigmoid(t[:, 1:2])], axis=1)


def init_linear(key, in_f, out_f):
    """Deterministic init mimicking torch.nn.Linear default (uniform +-1/sqrt(in))."""
    kw, kb = jax.random.split(key)
    bound = 1.0 / jnp.sqrt(jnp.float32(in_f))
    # Stored already transposed as (in_f, out_f); bias as (1, out_f).
    w = jax.random.uniform(kw, (in_f, out_f), jnp.float32, -bound, bound)
    b = jax.random.uniform(kb, (1, out_f), jnp.float32, -bound, bound)
    return w, b


def make_params(key, num_channels):
    C = num_channels
    keys = jax.random.split(key, 10)
    params = []
    # dynamics_net: (C+1->C), (C->C), (C->C)
    params += list(init_linear(keys[0], C + 1, C))
    params += list(init_linear(keys[1], C, C))
    params += list(init_linear(keys[2], C, C))
    # embedding_net: (C+1->C), (C->C), (C->C)
    params += list(init_linear(keys[3], C + 1, C))
    params += list(init_linear(keys[4], C, C))
    params += list(init_linear(keys[5], C, C))
    # reward_net: (C->C), (C->1)
    params += list(init_linear(keys[6], C, C))
    params += list(init_linear(keys[7], C, 1))
    # done_net: (C->C), (C->1)
    params += list(init_linear(keys[8], C, C))
    params += list(init_linear(keys[9], C, 1))
    return params


def pack_params(params, C):
    """Pack all 20 parameter arrays into one (rows, 2C) fp32 slab (done once)."""
    (dw0, db0, dw1, db1, dw2, db2,
     ew0, eb0, ew1, eb1, ew2, eb2,
     rw0, rb0, rw1, rb1,
     nw0, nb0, nw1, nb1) = params
    twoC = 2 * C

    def blkdiag(a, b):
        z1 = jnp.zeros((a.shape[0], b.shape[1]), jnp.float32)
        z2 = jnp.zeros((b.shape[0], a.shape[1]), jnp.float32)
        return jnp.concatenate(
            [jnp.concatenate([a, z1], axis=1),
             jnp.concatenate([z2, b], axis=1)], axis=0)

    def pad_rows(m, rows):
        return jnp.pad(m, ((0, rows - m.shape[0]), (0, 0)))

    def pad_cols(m, cols):
        return jnp.pad(m, ((0, 0), (0, cols - m.shape[1])))

    w0f = pad_rows(jnp.concatenate([dw0, ew0], axis=1), _align8(C + 1))
    b0f = pad_rows(jnp.concatenate([db0, eb0], axis=1), 8)
    w1f = blkdiag(dw1, ew1)
    b1f = pad_rows(jnp.concatenate([db1, eb1], axis=1), 8)
    w2f = blkdiag(dw2, ew2)
    b2f = pad_rows(jnp.concatenate([db2, eb2], axis=1), 8)
    wh0 = jnp.concatenate(
        [jnp.zeros((C, twoC), jnp.float32),
         jnp.concatenate([rw0, nw0], axis=1)], axis=0)
    bh0 = pad_rows(jnp.concatenate([rb0, nb0], axis=1), 8)
    wh1 = pad_cols(blkdiag(rw1, nw1), twoC)
    bh1 = pad_rows(pad_cols(jnp.concatenate([rb1, nb1], axis=1), twoC), 8)

    slab = jnp.concatenate(
        [w0f, b0f, w1f, b1f, w2f, b2f, wh0, bh0, wh1, bh1], axis=0)
    assert slab.shape == (_slab_offsets(C)["rows"], twoC)
    return slab


@functools.partial(jax.jit, static_argnames=("num_channels",))
def dynamics_forward(x, w_slab, *, num_channels):
    B = x.shape[0]
    C = num_channels
    cp = _align8(C + 1)
    x_pad = jnp.pad(x, ((0, 0), (0, cp - x.shape[1])))  # lane-pad input to aligned width

    vmem = pl.BlockSpec(memory_space=pltpu.MemorySpace.VMEM)
    out = pl.pallas_call(
        functools.partial(dynamics_kernel, C=C),
        out_shape=jax.ShapeDtypeStruct((B, C + 2), jnp.float32),
        in_specs=[vmem, vmem],
        out_specs=vmem,
    )(x_pad, w_slab)

    next_lat = out[:, :C]
    reward = out[:, C]            # nn.Flatten(0) of (B, 1) -> (B,)
    done = out[:, C + 1]
    return next_lat, reward, done


def reference_forward(x, params):
    (dw0, db0, dw1, db1, dw2, db2,
     ew0, eb0, ew1, eb1, ew2, eb2,
     rw0, rb0, rw1, rb1,
     nw0, nb0, nw1, nb1) = params

    def mlp3(h, w0, b0, w1, b1, w2, b2):
        h = jax.nn.relu(h @ w0 + b0)
        h = jax.nn.relu(h @ w1 + b1)
        return h @ w2 + b2

    nxt = mlp3(x, dw0, db0, dw1, db1, dw2, db2)
    emb = mlp3(x, ew0, eb0, ew1, eb1, ew2, eb2)
    rew = (jax.nn.relu(emb @ rw0 + rb0) @ rw1 + rb1).reshape(-1)
    done = jax.nn.sigmoid(jax.nn.relu(emb @ nw0 + nb0) @ nw1 + nb1).reshape(-1)
    return nxt, rew, done


if __name__ == "__main__":
    num_channels = 32
    batch = 8

    key = jax.random.PRNGKey(0)
    kx, kp = jax.random.split(key)
    x = jax.random.normal(kx, (batch, num_channels + 1), jnp.float32)
    params = make_params(kp, num_channels)
    w_slab = pack_params(params, num_channels)   # packed once, reused every call

    next_lat, reward, done = dynamics_forward(x, w_slab, num_channels=num_channels)
    jax.block_until_ready((next_lat, reward, done))

    ref_next, ref_rew, ref_done = reference_forward(x, params)
    assert next_lat.shape == (batch, num_channels)
    assert reward.shape == (batch,)
    assert done.shape == (batch,)
    assert jnp.allclose(next_lat, ref_next, atol=1e-5, rtol=1e-5)
    assert jnp.allclose(reward, ref_rew, atol=1e-5, rtol=1e-5)
    assert jnp.allclose(done, ref_done, atol=1e-5, rtol=1e-5)

    print("KERNEL_OK")
</pallas_src>

<mosaic_0001>
module attributes {stable_mosaic.version = 11 : i64} {
  func.func @dynamics_kernel(%arg0: memref<8x40xf32, #tpu.memory_space<vmem>>, %arg1: memref<336x64xf32, #tpu.memory_space<vmem>>, %arg2: memref<8x34xf32, #tpu.memory_space<vmem>>) attributes {dimension_semantics = [], scalar_prefetch = 0 : i64, scratch_operands = 0 : i64, tpu.core_type = #tpu.core_type<tc>} {
    %c0 = arith.constant 0 : index
    %c0_0 = arith.constant 0 : index
    %0 = vector.load %arg0[%c0, %c0_0] : memref<8x40xf32, #tpu.memory_space<vmem>>, vector<8x40xf32>
    %c0_1 = arith.constant 0 : index
    %c0_2 = arith.constant 0 : index
    %1 = vector.load %arg1[%c0_1, %c0_2] : memref<336x64xf32, #tpu.memory_space<vmem>>, vector<40x64xf32>
    %cst = arith.constant dense<0.000000e+00> : vector<8x64xf32>
    %2 = tpu.matmul %0, %1, %cst {dimension_numbers = #tpu.dot_dimension_numbers<[1], [0], [0], [1], [0, 0, 1, 1], [], []>} : vector<8x40xf32>, vector<40x64xf32>, vector<8x64xf32> -> vector<8x64xf32>
    %c40 = arith.constant 40 : index
    %c0_3 = arith.constant 0 : index
    %3 = vector.load %arg1[%c40, %c0_3] : memref<336x64xf32, #tpu.memory_space<vmem>>, vector<1x64xf32>
    %4 = vector.broadcast %3 : vector<1x64xf32> to vector<8x64xf32>
    %5 = arith.addf %2, %4 : vector<8x64xf32>
    %cst_4 = arith.constant 0.000000e+00 : f32
    %6 = vector.broadcast %cst_4 : f32 to vector<8x64xf32>
    %7 = arith.maximumf %5, %6 : vector<8x64xf32>
    %c48 = arith.constant 48 : index
    %c0_5 = arith.constant 0 : index
    %8 = vector.load %arg1[%c48, %c0_5] : memref<336x64xf32, #tpu.memory_space<vmem>>, vector<64x64xf32>
    %cst_6 = arith.constant dense<0.000000e+00> : vector<8x64xf32>
    %9 = tpu.matmul %7, %8, %cst_6 {dimension_numbers = #tpu.dot_dimension_numbers<[1], [0], [0], [1], [0, 0, 1, 1], [], []>} : vector<8x64xf32>, vector<64x64xf32>, vector<8x64xf32> -> vector<8x64xf32>
    %c112 = arith.constant 112 : index
    %c0_7 = arith.constant 0 : index
    %10 = vector.load %arg1[%c112, %c0_7] : memref<336x64xf32, #tpu.memory_space<vmem>>, vector<1x64xf32>
    %11 = vector.broadcast %10 : vector<1x64xf32> to vector<8x64xf32>
    %12 = arith.addf %9, %11 : vector<8x64xf32>
    %cst_8 = arith.constant 0.000000e+00 : f32
    %13 = vector.broadcast %cst_8 : f32 to vector<8x64xf32>
    %14 = arith.maximumf %12, %13 : vector<8x64xf32>
    %c120 = arith.constant 120 : index
    %c0_9 = arith.constant 0 : index
    %15 = vector.load %arg1[%c120, %c0_9] : memref<336x64xf32, #tpu.memory_space<vmem>>, vector<64x64xf32>
    %cst_10 = arith.constant dense<0.000000e+00> : vector<8x64xf32>
    %16 = tpu.matmul %14, %15, %cst_10 {dimension_numbers = #tpu.dot_dimension_numbers<[1], [0], [0], [1], [0, 0, 1, 1], [], []>} : vector<8x64xf32>, vector<64x64xf32>, vector<8x64xf32> -> vector<8x64xf32>
    %c184 = arith.constant 184 : index
    %c0_11 = arith.constant 0 : index
    %17 = vector.load %arg1[%c184, %c0_11] : memref<336x64xf32, #tpu.memory_space<vmem>>, vector<1x64xf32>
    %18 = vector.broadcast %17 : vector<1x64xf32> to vector<8x64xf32>
    %19 = arith.addf %16, %18 : vector<8x64xf32>
    %c192 = arith.constant 192 : index
    %c0_12 = arith.constant 0 : index
    %20 = vector.load %arg1[%c192, %c0_12] : memref<336x64xf32, #tpu.memory_space<vmem>>, vector<64x64xf32>
    %cst_13 = arith.constant dense<0.000000e+00> : vector<8x64xf32>
    %21 = tpu.matmul %19, %20, %cst_13 {dimension_numbers = #tpu.dot_dimension_numbers<[1], [0], [0], [1], [0, 0, 1, 1], [], []>} : vector<8x64xf32>, vector<64x64xf32>, vector<8x64xf32> -> vector<8x64xf32>
    %c256 = arith.constant 256 : index
    %c0_14 = arith.constant 0 : index
    %22 = vector.load %arg1[%c256, %c0_14] : memref<336x64xf32, #tpu.memory_space<vmem>>, vector<1x64xf32>
    %23 = vector.broadcast %22 : vector<1x64xf32> to vector<8x64xf32>
    %24 = arith.addf %21, %23 : vector<8x64xf32>
    %cst_15 = arith.constant 0.000000e+00 : f32
    %25 = vector.broadcast %cst_15 : f32 to vector<8x64xf32>
    %26 = arith.maximumf %24, %25 : vector<8x64xf32>
    %c264 = arith.constant 264 : index
    %c0_16 = arith.constant 0 : index
    %27 = vector.load %arg1[%c264, %c0_16] : memref<336x64xf32, #tpu.memory_space<vmem>>, vector<64x64xf32>
    %cst_17 = arith.constant dense<0.000000e+00> : vector<8x64xf32>
    %28 = tpu.matmul %26, %27, %cst_17 {dimension_numbers = #tpu.dot_dimension_numbers<[1], [0], [0], [1], [0, 0, 1, 1], [], []>} : vector<8x64xf32>, vector<64x64xf32>, vector<8x64xf32> -> vector<8x64xf32>
    %c328 = arith.constant 328 : index
    %c0_18 = arith.constant 0 : index
    %29 = vector.load %arg1[%c328, %c0_18] : memref<336x64xf32, #tpu.memory_space<vmem>>, vector<1x64xf32>
    %30 = vector.broadcast %29 : vector<1x64xf32> to vector<8x64xf32>
    %31 = arith.addf %28, %30 : vector<8x64xf32>
    %32 = vector.extract_strided_slice %19 {offsets = [0, 0], sizes = [8, 32], strides = [1, 1]} : vector<8x64xf32> to vector<8x32xf32>
    %33 = vector.extract_strided_slice %31 {offsets = [0, 0], sizes = [8, 1], strides = [1, 1]} : vector<8x64xf32> to vector<8x1xf32>
    %34 = vector.extract_strided_slice %31 {offsets = [0, 1], sizes = [8, 1], strides = [1, 1]} : vector<8x64xf32> to vector<8x1xf32>
    %35 = arith.negf %34 : vector<8x1xf32>
    %36 = math.exp %35 : vector<8x1xf32>
    %cst_19 = arith.constant 1.000000e+00 : f32
    %37 = vector.broadcast %cst_19 : f32 to vector<8x1xf32>
    %38 = arith.addf %37, %36 : vector<8x1xf32>
    %39 = arith.divf %37, %38 : vector<8x1xf32>
    %40 = tpu.concatenate %32, %33, %39 in 1 : vector<8x32xf32>, vector<8x1xf32>, vector<8x1xf32> -> vector<8x34xf32>
    %c0_20 = arith.constant 0 : index
    %c0_21 = arith.constant 0 : index
    %41 = vector.load %arg2[%c0_20, %c0_21] : memref<8x34xf32, #tpu.memory_space<vmem>>, vector<8x34xf32>
    tpu.vector_store %arg2[%c0_20, %c0_21], %40 {strides = array<i32>} : memref<8x34xf32, #tpu.memory_space<vmem>>, vector<8x34xf32>,
    return
  }
}

</mosaic_0001>

<llo_original>
// kernel: dynamics_forward.1
$region0: #{dynamics_forward.1}
  #allocation0 [shape = 'u32[]', space=smem, size = 0x4, offset = 0x4, fixed_abs, tag = 'smem constant byte address 0x4 - core index']
  #allocation1 [shape = 'u32[144,128]{1,0:T(1,128)}', space=vmem, size = 0x12000, scoped, tag = 'internal scratch']
  %s0 = inlined_call_operand.vmem [shape: f32[8,40], index: 0, kind: input, shape index: {}]
  %s1 = inlined_call_operand.vmem [shape: f32[336,64], index: 1, kind: input, shape index: {}]
  %s2 = inlined_call_operand.vmem [shape: f32[8,34], index: 2, kind: output, shape index: {}]
  %s3 = sld [smem:[#allocation0]]
  $region18: #{dynamics_forward.1} parent=0
    _
  %s5 = ssub.s32 1, %s3
  %s6 = scalar_select 0, %s5, %s3
  // Predicated region
  $region2: #{dynamics_forward.1} parent=0 // pred_check
    _
  $region3: #{dynamics_forward.1} parent=0 // pred_check_branch
    %8 = sbr.rel (0) target = $region5
  $region4: #{dynamics_forward.1} parent=0 // pred_region
    _
  $region5: #{dynamics_forward.1} parent=0 // pred_fallthru
    _
  // Predicated region
  $region6: #{dynamics_forward.1} parent=0 // pred_check
    _
  $region7: #{dynamics_forward.1} parent=0 // pred_check_branch
    %10 = sbr.rel (0) target = $region9
  $region8: #{dynamics_forward.1} parent=0 // pred_region
    _
  $region9: #{dynamics_forward.1} parent=0 // pred_fallthru
    _
  %v11 = vld [vmem:[%s0] sm:$0xff]
  %v12 = vld [vmem:[%s1] sm:$0xff]
  %v13 = vld [vmem:[%s1 + $0x8] sm:$0xff]
  %v14 = vld [vmem:[%s1 + $0x10] sm:$0xff]
  %v15 = vld [vmem:[%s1 + $0x18] sm:$0xff]
  %v16 = vld [vmem:[%s1 + $0x20] sm:$0xff]
  %v17 = vld [vmem:[%s1 + $0x28] sm:$0x1]
  %v18 = vlaneseq
  %v19 = vshrl.u32 %v18, 7
  %v20 = vsub.s32 0, %v19
  %v21 = vrot.slane %v17, %v20
  %vm22 = vcmask 326656
  %v24 = vsel %vm22, %v11, 0
  %26 = vmatprep.subr.mxu0 0.0
  %27 = vmatpush1.msra.mxu0 0.0
  %28 = vmatprep.subr.mxu0 0.0
  %29 = vmatpush1.msra.mxu0 0.0
  %30 = vmatprep.subr.mxu0 0.0
  %31 = vmatpush1.msra.mxu0 0.0
  %32 = vmatprep.subr.mxu0 0.0
  %33 = vmatpush1.msra.mxu0 0.0
  %34 = vmatprep.subr.mxu0 0.0
  %35 = vmatpush1.msra.mxu0 0.0
  %36 = vmatprep.subr.mxu0 0.0
  %37 = vmatpush1.msra.mxu0 0.0
  %38 = vmatprep.subr.mxu0 0.0
  %39 = vmatpush1.msra.mxu0 0.0
  %40 = vmatprep.subr.mxu0 0.0
  %41 = vmatpush1.msra.mxu0 0.0
  %42 = vmatprep.subr.mxu0 0.0
  %43 = vmatpush1.msra.mxu0 0.0
  %44 = vmatprep.subr.mxu0 0.0
  %45 = vmatpush1.msra.mxu0 0.0
  %46 = vmatprep.subr.mxu0 0.0
  %47 = vmatpush1.msra.mxu0 0.0
  %48 = vmatprep.subr.mxu0 0.0
  %49 = vmatpush1.msra.mxu0 %v16
  %50 = vmatprep.subr.mxu0 0.0
  %51 = vmatpush1.msra.mxu0 %v15
  %52 = vmatprep.subr.mxu0 0.0
  %53 = vmatpush1.msra.mxu0 %v14
  %54 = vmatprep.subr.mxu0 0.0
  %55 = vmatpush1.msra.mxu0 %v13
  %56 = vmatprep.subr.mxu0 0.0
  %57 = vmatpush1.msra.mxu0 %v12
  %58 = vmatprep.subr.mxu0 0.0
  %59 = vmatpush2.msra.mxu0 0.0
  %60 = vmatprep.subr.mxu0 0.0
  %61 = vmatpush2.msra.mxu0 0.0
  %62 = vmatprep.subr.mxu0 0.0
  %63 = vmatpush2.msra.mxu0 0.0
  %64 = vmatprep.subr.mxu0 0.0
  %65 = vmatpush2.msra.mxu0 0.0
  %66 = vmatprep.subr.mxu0 0.0
  %67 = vmatpush2.msra.mxu0 0.0
  %68 = vmatprep.subr.mxu0 0.0
  %69 = vmatpush2.msra.mxu0 0.0
  %70 = vmatprep.subr.mxu0 0.0
  %71 = vmatpush2.msra.mxu0 0.0
  %72 = vmatprep.subr.mxu0 0.0
  %73 = vmatpush2.msra.mxu0 0.0
  %74 = vmatprep.subr.mxu0 0.0
  %75 = vmatpush2.msra.mxu0 0.0
  %76 = vmatprep.subr.mxu0 0.0
  %77 = vmatpush2.msra.mxu0 0.0
  %78 = vmatprep.subr.mxu0 0.0
  %79 = vmatpush2.msra.mxu0 0.0
  %80 = vmatprep.subr.mxu0 0.0
  %81 = vmatpush2.msra.mxu0 0.0
  %82 = vmatprep.subr.mxu0 0.0
  %83 = vmatpush2.msra.mxu0 0.0
  %84 = vmatprep.subr.mxu0 0.0
  %85 = vmatpush2.msra.mxu0 0.0
  %86 = vmatprep.subr.mxu0 0.0
  %87 = vmatpush2.msra.mxu0 0.0
  %88 = vmatprep.subr.mxu0 0.0
  %89 = vmatpush2.msra.mxu0 0.0
  %90 = vmatprep.mubr.f32.mxu0 0.0
  %91 = vmatmul.mubr.f32.gmra.mxu0 %v24
  %v92 = vpop.f32.mrf.mxu0
  %v93 = vadd.f32 %v21, %v92
  %v94 = vpop.f32.mrf.mxu0
  %95 = vdwg.mxu0
  %v96 = vmax.f32 %v93, 0.0
  %v97 = vld [vmem:[%s1 + $0x30] sm:$0xff]
  %v98 = vld [vmem:[%s1 + $0x38] sm:$0xff]
  %v99 = vld [vmem:[%s1 + $0x40] sm:$0xff]
  %v100 = vld [vmem:[%s1 + $0x48] sm:$0xff]
  %v101 = vld [vmem:[%s1 + $0x50] sm:$0xff]
  %v102 = vld [vmem:[%s1 + $0x58] sm:$0xff]
  %v103 = vld [vmem:[%s1 + $0x60] sm:$0xff]
  %v104 = vld [vmem:[%s1 + $0x68] sm:$0xff]
  %v105 = vld [vmem:[%s1 + $0x70] sm:$0x1]
  %v106 = vlaneseq
  %v107 = vshrl.u32 %v106, 7
  %v108 = vsub.s32 0, %v107
  %v109 = vrot.slane %v105, %v108
  %vm110 = vcmask 523264
  %v112 = vsel %vm110, %v96, 0
  %114 = vmatprep.subr.mxu0 0.0
  %115 = vmatpush1.msra.mxu0 0.0
  %116 = vmatprep.subr.mxu0 0.0
  %117 = vmatpush1.msra.mxu0 0.0
  %118 = vmatprep.subr.mxu0 0.0
  %119 = vmatpush1.msra.mxu0 0.0
  %120 = vmatprep.subr.mxu0 0.0
  %121 = vmatpush1.msra.mxu0 0.0
  %122 = vmatprep.subr.mxu0 0.0
  %123 = vmatpush1.msra.mxu0 0.0
  %124 = vmatprep.subr.mxu0 0.0
  %125 = vmatpush1.msra.mxu0 0.0
  %126 = vmatprep.subr.mxu0 0.0
  %127 = vmatpush1.msra.mxu0 0.0
  %128 = vmatprep.subr.mxu0 0.0
  %129 = vmatpush1.msra.mxu0 0.0
  %130 = vmatprep.subr.mxu0 0.0
  %131 = vmatpush1.msra.mxu0 %v104
  %132 = vmatprep.subr.mxu0 0.0
  %133 = vmatpush1.msra.mxu0 %v103
  %134 = vmatprep.subr.mxu0 0.0
  %135 = vmatpush1.msra.mxu0 %v102
  %136 = vmatprep.subr.mxu0 0.0
  %137 = vmatpush1.msra.mxu0 %v101
  %138 = vmatprep.subr.mxu0 0.0
  %139 = vmatpush1.msra.mxu0 %v100
  %140 = vmatprep.subr.mxu0 0.0
  %141 = vmatpush1.msra.mxu0 %v99
  %142 = vmatprep.subr.mxu0 0.0
  %143 = vmatpush1.msra.mxu0 %v98
  %144 = vmatprep.subr.mxu0 0.0
  %145 = vmatpush1.msra.mxu0 %v97
  %146 = vmatprep.subr.mxu0 0.0
  %147 = vmatpush2.msra.mxu0 0.0
  %148 = vmatprep.subr.mxu0 0.0
  %149 = vmatpush2.msra.mxu0 0.0
  %150 = vmatprep.subr.mxu0 0.0
  %151 = vmatpush2.msra.mxu0 0.0
  %152 = vmatprep.subr.mxu0 0.0
  %153 = vmatpush2.msra.mxu0 0.0
  %154 = vmatprep.subr.mxu0 0.0
  %155 = vmatpush2.msra.mxu0 0.0
  %156 = vmatprep.subr.mxu0 0.0
  %157 = vmatpush2.msra.mxu0 0.0
  %158 = vmatprep.subr.mxu0 0.0
  %159 = vmatpush2.msra.mxu0 0.0
  %160 = vmatprep.subr.mxu0 0.0
  %161 = vmatpush2.msra.mxu0 0.0
  %162 = vmatprep.subr.mxu0 0.0
  %163 = vmatpush2.msra.mxu0 0.0
  %164 = vmatprep.subr.mxu0 0.0
  %165 = vmatpush2.msra.mxu0 0.0
  %166 = vmatprep.subr.mxu0 0.0
  %167 = vmatpush2.msra.mxu0 0.0
  %168 = vmatprep.subr.mxu0 0.0
  %169 = vmatpush2.msra.mxu0 0.0
  %170 = vmatprep.subr.mxu0 0.0
  %171 = vmatpush2.msra.mxu0 0.0
  %172 = vmatprep.subr.mxu0 0.0
  %173 = vmatpush2.msra.mxu0 0.0
  %174 = vmatprep.subr.mxu0 0.0
  %175 = vmatpush2.msra.mxu0 0.0
  %176 = vmatprep.subr.mxu0 0.0
  %177 = vmatpush2.msra.mxu0 0.0
  %178 = vmatprep.mubr.f32.mxu0 0.0
  %179 = vmatmul.mubr.f32.gmra.mxu0 %v112
  %v180 = vpop.f32.mrf.mxu0
  %v181 = vadd.f32 %v109, %v180
  %v182 = vpop.f32.mrf.mxu0
  %183 = vdwg.mxu0
  %v184 = vmax.f32 %v181, 0.0
  %v185 = vld [vmem:[%s1 + $0x78] sm:$0xff]
  %v186 = vld [vmem:[%s1 + $0x80] sm:$0xff]
  %v187 = vld [vmem:[%s1 + $0x88] sm:$0xff]
  %v188 = vld [vmem:[%s1 + $0x90] sm:$0xff]
  %v189 = vld [vmem:[%s1 + $0x98] sm:$0xff]
  %v190 = vld [vmem:[%s1 + $0xa0] sm:$0xff]
  %v191 = vld [vmem:[%s1 + $0xa8] sm:$0xff]
  %v192 = vld [vmem:[%s1 + $0xb0] sm:$0xff]
  %v193 = vld [vmem:[%s1 + $0xb8] sm:$0x1]
  %v194 = vlaneseq
  %v195 = vshrl.u32 %v194, 7
  %v196 = vsub.s32 0, %v195
  %v197 = vrot.slane %v193, %v196
  %v199 = vsel %vm110, %v184, 0
  %201 = vmatprep.subr.mxu0 0.0
  %202 = vmatpush1.msra.mxu0 0.0
  %203 = vmatprep.subr.mxu0 0.0
  %204 = vmatpush1.msra.mxu0 0.0
  %205 = vmatprep.subr.mxu0 0.0
  %206 = vmatpush1.msra.mxu0 0.0
  %207 = vmatprep.subr.mxu0 0.0
  %208 = vmatpush1.msra.mxu0 0.0
  %209 = vmatprep.subr.mxu0 0.0
  %210 = vmatpush1.msra.mxu0 0.0
  %211 = vmatprep.subr.mxu0 0.0
  %212 = vmatpush1.msra.mxu0 0.0
  %213 = vmatprep.subr.mxu0 0.0
  %214 = vmatpush1.msra.mxu0 0.0
  %215 = vmatprep.subr.mxu0 0.0
  %216 = vmatpush1.msra.mxu0 0.0
  %217 = vmatprep.subr.mxu0 0.0
  %218 = vmatpush1.msra.mxu0 %v192
  %219 = vmatprep.subr.mxu0 0.0
  %220 = vmatpush1.msra.mxu0 %v191
  %221 = vmatprep.subr.mxu0 0.0
  %222 = vmatpush1.msra.mxu0 %v190
  %223 = vmatprep.subr.mxu0 0.0
  %224 = vmatpush1.msra.mxu0 %v189
  %225 = vmatprep.subr.mxu0 0.0
  %226 = vmatpush1.msra.mxu0 %v188
  %227 = vmatprep.subr.mxu0 0.0
  %228 = vmatpush1.msra.mxu0 %v187
  %229 = vmatprep.subr.mxu0 0.0
  %230 = vmatpush1.msra.mxu0 %v186
  %231 = vmatprep.subr.mxu0 0.0
  %232 = vmatpush1.msra.mxu0 %v185
  %233 = vmatprep.subr.mxu0 0.0
  %234 = vmatpush2.msra.mxu0 0.0
  %235 = vmatprep.subr.mxu0 0.0
  %236 = vmatpush2.msra.mxu0 0.0
  %237 = vmatprep.subr.mxu0 0.0
  %238 = vmatpush2.msra.mxu0 0.0
  %239 = vmatprep.subr.mxu0 0.0
  %240 = vmatpush2.msra.mxu0 0.0
  %241 = vmatprep.subr.mxu0 0.0
  %242 = vmatpush2.msra.mxu0 0.0
  %243 = vmatprep.subr.mxu0 0.0
  %244 = vmatpush2.msra.mxu0 0.0
  %245 = vmatprep.subr.mxu0 0.0
  %246 = vmatpush2.msra.mxu0 0.0
  %247 = vmatprep.subr.mxu0 0.0
  %248 = vmatpush2.msra.mxu0 0.0
  %249 = vmatprep.subr.mxu0 0.0
  %250 = vmatpush2.msra.mxu0 0.0
  %251 = vmatprep.subr.mxu0 0.0
  %252 = vmatpush2.msra.mxu0 0.0
  %253 = vmatprep.subr.mxu0 0.0
  %254 = vmatpush2.msra.mxu0 0.0
  %255 = vmatprep.subr.mxu0 0.0
  %256 = vmatpush2.msra.mxu0 0.0
  %257 = vmatprep.subr.mxu0 0.0
  %258 = vmatpush2.msra.mxu0 0.0
  %259 = vmatprep.subr.mxu0 0.0
  %260 = vmatpush2.msra.mxu0 0.0
  %261 = vmatprep.subr.mxu0 0.0
  %262 = vmatpush2.msra.mxu0 0.0
  %263 = vmatprep.subr.mxu0 0.0
  %264 = vmatpush2.msra.mxu0 0.0
  %265 = vmatprep.mubr.f32.mxu0 0.0
  %266 = vmatmul.mubr.f32.gmra.mxu0 %v199
  %v267 = vpop.f32.mrf.mxu0
  %v268 = vadd.f32 %v197, %v267
  %v269 = vpop.f32.mrf.mxu0
  %270 = vdwg.mxu0
  %v271 = vld [vmem:[%s1 + $0xc0] sm:$0xff]
  %v272 = vld [vmem:[%s1 + $0xc8] sm:$0xff]
  %v273 = vld [vmem:[%s1 + $0xd0] sm:$0xff]
  %v274 = vld [vmem:[%s1 + $0xd8] sm:$0xff]
  %v275 = vld [vmem:[%s1 + $0xe0] sm:$0xff]
  %v276 = vld [vmem:[%s1 + $0xe8] sm:$0xff]
  %v277 = vld [vmem:[%s1 + $0xf0] sm:$0xff]
  %v278 = vld [vmem:[%s1 + $0xf8] sm:$0xff]
  %v279 = vld [vmem:[%s1 + $0x100] sm:$0x1]
  %v280 = vlaneseq
  %v281 = vshrl.u32 %v280, 7
  %v282 = vsub.s32 0, %v281
  %v283 = vrot.slane %v279, %v282
  %v285 = vsel %vm110, %v268, 0
  %287 = vmatprep.subr.mxu0 0.0
  %288 = vmatpush1.msra.mxu0 0.0
  %289 = vmatprep.subr.mxu0 0.0
  %290 = vmatpush1.msra.mxu0 0.0
  %291 = vmatprep.subr.mxu0 0.0
  %292 = vmatpush1.msra.mxu0 0.0
  %293 = vmatprep.subr.mxu0 0.0
  %294 = vmatpush1.msra.mxu0 0.0
  %295 = vmatprep.subr.mxu0 0.0
  %296 = vmatpush1.msra.mxu0 0.0
  %297 = vmatprep.subr.mxu0 0.0
  %298 = vmatpush1.msra.mxu0 0.0
  %299 = vmatprep.subr.mxu0 0.0
  %300 = vmatpush1.msra.mxu0 0.0
  %301 = vmatprep.subr.mxu0 0.0
  %302 = vmatpush1.msra.mxu0 0.0
  %303 = vmatprep.subr.mxu0 0.0
  %304 = vmatpush1.msra.mxu0 %v278
  %305 = vmatprep.subr.mxu0 0.0
  %306 = vmatpush1.msra.mxu0 %v277
  %307 = vmatprep.subr.mxu0 0.0
  %308 = vmatpush1.msra.mxu0 %v276
  %309 = vmatprep.subr.mxu0 0.0
  %310 = vmatpush1.msra.mxu0 %v275
  %311 = vmatprep.subr.mxu0 0.0
  %312 = vmatpush1.msra.mxu0 %v274
  %313 = vmatprep.subr.mxu0 0.0
  %314 = vmatpush1.msra.mxu0 %v273
  %315 = vmatprep.subr.mxu0 0.0
  %316 = vmatpush1.msra.mxu0 %v272
  %317 = vmatprep.subr.mxu0 0.0
  %318 = vmatpush1.msra.mxu0 %v271
  %319 = vmatprep.subr.mxu0 0.0
  %320 = vmatpush2.msra.mxu0 0.0
  %321 = vmatprep.subr.mxu0 0.0
  %322 = vmatpush2.msra.mxu0 0.0
  %323 = vmatprep.subr.mxu0 0.0
  %324 = vmatpush2.msra.mxu0 0.0
  %325 = vmatprep.subr.mxu0 0.0
  %326 = vmatpush2.msra.mxu0 0.0
  %327 = vmatprep.subr.mxu0 0.0
  %328 = vmatpush2.msra.mxu0 0.0
  %329 = vmatprep.subr.mxu0 0.0
  %330 = vmatpush2.msra.mxu0 0.0
  %331 = vmatprep.subr.mxu0 0.0
  %332 = vmatpush2.msra.mxu0 0.0
  %333 = vmatprep.subr.mxu0 0.0
  %334 = vmatpush2.msra.mxu0 0.0
  %335 = vmatprep.subr.mxu0 0.0
  %336 = vmatpush2.msra.mxu0 0.0
  %337 = vmatprep.subr.mxu0 0.0
  %338 = vmatpush2.msra.mxu0 0.0
  %339 = vmatprep.subr.mxu0 0.0
  %340 = vmatpush2.msra.mxu0 0.0
  %341 = vmatprep.subr.mxu0 0.0
  %342 = vmatpush2.msra.mxu0 0.0
  %343 = vmatprep.subr.mxu0 0.0
  %344 = vmatpush2.msra.mxu0 0.0
  %345 = vmatprep.subr.mxu0 0.0
  %346 = vmatpush2.msra.mxu0 0.0
  %347 = vmatprep.subr.mxu0 0.0
  %348 = vmatpush2.msra.mxu0 0.0
  %349 = vmatprep.subr.mxu0 0.0
  %350 = vmatpush2.msra.mxu0 0.0
  %351 = vmatprep.mubr.f32.mxu0 0.0
  %352 = vmatmul.mubr.f32.gmra.mxu0 %v285
  %v353 = vpop.f32.mrf.mxu0
  %v354 = vadd.f32 %v283, %v353
  %v355 = vpop.f32.mrf.mxu0
  %356 = vdwg.mxu0
  %v357 = vmax.f32 %v354, 0.0
  %v358 = vld [vmem:[%s1 + $0x108] sm:$0xff]
  %v359 = vld [vmem:[%s1 + $0x110] sm:$0xff]
  %v360 = vld [vmem:[%s1 + $0x118] sm:$0xff]
  %v361 = vld [vmem:[%s1 + $0x120] sm:$0xff]
  %v362 = vld [vmem:[%s1 + $0x128] sm:$0xff]
  %v363 = vld [vmem:[%s1 + $0x130] sm:$0xff]
  %v364 = vld [vmem:[%s1 + $0x138] sm:$0xff]
  %v365 = vld [vmem:[%s1 + $0x140] sm:$0xff]
  %v366 = vld [vmem:[%s1 + $0x148] sm:$0x1]
  %v367 = vlaneseq
  %v368 = vshrl.u32 %v367, 7
  %v369 = vsub.s32 0, %v368
  %v370 = vrot.slane %v366, %v369
  %v372 = vsel %vm110, %v357, 0
  %374 = vmatprep.subr.mxu0 0.0
  %375 = vmatpush1.msra.mxu0 0.0
  %376 = vmatprep.subr.mxu0 0.0
  %377 = vmatpush1.msra.mxu0 0.0
  %378 = vmatprep.subr.mxu0 0.0
  %379 = vmatpush1.msra.mxu0 0.0
  %380 = vmatprep.subr.mxu0 0.0
  %381 = vmatpush1.msra.mxu0 0.0
  %382 = vmatprep.subr.mxu0 0.0
  %383 = vmatpush1.msra.mxu0 0.0
  %384 = vmatprep.subr.mxu0 0.0
  %385 = vmatpush1.msra.mxu0 0.0
  %386 = vmatprep.subr.mxu0 0.0
  %387 = vmatpush1.msra.mxu0 0.0
  %388 = vmatprep.subr.mxu0 0.0
  %389 = vmatpush1.msra.mxu0 0.0
  %390 = vmatprep.subr.mxu0 0.0
  %391 = vmatpush1.msra.mxu0 %v365
  %392 = vmatprep.subr.mxu0 0.0
  %393 = vmatpush1.msra.mxu0 %v364
  %394 = vmatprep.subr.mxu0 0.0
  %395 = vmatpush1.msra.mxu0 %v363
  %396 = vmatprep.subr.mxu0 0.0
  %397 = vmatpush1.msra.mxu0 %v362
  %398 = vmatprep.subr.mxu0 0.0
  %399 = vmatpush1.msra.mxu0 %v361
  %400 = vmatprep.subr.mxu0 0.0
  %401 = vmatpush1.msra.mxu0 %v360
  %402 = vmatprep.subr.mxu0 0.0
  %403 = vmatpush1.msra.mxu0 %v359
  %404 = vmatprep.subr.mxu0 0.0
  %405 = vmatpush1.msra.mxu0 %v358
  %406 = vmatprep.subr.mxu0 0.0
  %407 = vmatpush2.msra.mxu0 0.0
  %408 = vmatprep.subr.mxu0 0.0
  %409 = vmatpush2.msra.mxu0 0.0
  %410 = vmatprep.subr.mxu0 0.0
  %411 = vmatpush2.msra.mxu0 0.0
  %412 = vmatprep.subr.mxu0 0.0
  %413 = vmatpush2.msra.mxu0 0.0
  %414 = vmatprep.subr.mxu0 0.0
  %415 = vmatpush2.msra.mxu0 0.0
  %416 = vmatprep.subr.mxu0 0.0
  %417 = vmatpush2.msra.mxu0 0.0
  %418 = vmatprep.subr.mxu0 0.0
  %419 = vmatpush2.msra.mxu0 0.0
  %420 = vmatprep.subr.mxu0 0.0
  %421 = vmatpush2.msra.mxu0 0.0
  %422 = vmatprep.subr.mxu0 0.0
  %423 = vmatpush2.msra.mxu0 0.0
  %424 = vmatprep.subr.mxu0 0.0
  %425 = vmatpush2.msra.mxu0 0.0
  %426 = vmatprep.subr.mxu0 0.0
  %427 = vmatpush2.msra.mxu0 0.0
  %428 = vmatprep.subr.mxu0 0.0
  %429 = vmatpush2.msra.mxu0 0.0
  %430 = vmatprep.subr.mxu0 0.0
  %431 = vmatpush2.msra.mxu0 0.0
  %432 = vmatprep.subr.mxu0 0.0
  %433 = vmatpush2.msra.mxu0 0.0
  %434 = vmatprep.subr.mxu0 0.0
  %435 = vmatpush2.msra.mxu0 0.0
  %436 = vmatprep.subr.mxu0 0.0
  %437 = vmatpush2.msra.mxu0 0.0
  %438 = vmatprep.mubr.f32.mxu0 0.0
  %439 = vmatmul.mubr.f32.gmra.mxu0 %v372
  %v440 = vpop.f32.mrf.mxu0
  %v441 = vadd.f32 %v370, %v440
  %v442 = vpop.f32.mrf.mxu0
  %443 = vdwg.mxu0
  %v444 = vxor.u32 %v441, 2147483648
  %v445 = vmul.f32 %v444, 1.442695
  %v446 = vpow.pop %v445
  %v447 = vadd.f32 %v446, 1.0
  %v448 = vrcp.pop %v447
  %v449 = vmul.f32 1.0, %v448
  %451 = vrot.lane.b32.xlu0 %v441, 32
  %v452 = vpop.permute.xlu0 %451
  %455 = vrot.lane.b32.xlu0 %v449, 32
  %v456 = vpop.permute.xlu0 %455
  %vm458 = vcmask 261120
  %v459 = vsel %vm458, %v268, %v452
  %vm460 = vcmask 269312
  %v461 = vsel %vm460, %v459, %v456
  %vm462 = vcmask 277504
  %463 = vst.msk [vmem:[%s2] sm:$0xff] %vm462, %v461
  // Predicated region
  $region10: #{dynamics_forward.1} parent=0 // pred_check
    _
  $region11: #{dynamics_forward.1} parent=0 // pred_check_branch
    %465 = sbr.rel (0) target = $region13
  $region12: #{dynamics_forward.1} parent=0 // pred_region
    _
  $region13: #{dynamics_forward.1} parent=0 // pred_fallthru
    _
  // Predicated region
  $region14: #{dynamics_forward.1} parent=0 // pred_check
    _
  $region15: #{dynamics_forward.1} parent=0 // pred_check_branch
    %467 = sbr.rel (0) target = $region17
  $region16: #{dynamics_forward.1} parent=0 // pred_region
    _
  $region17: #{dynamics_forward.1} parent=0 // pred_fallthru
    _

</llo_original>
